<compile_context>
chip_gen: v5e
topology: v5e:2x2
jax: 0.10.0
libtpu: 0.0.40
codegen_flags: <defaults>
</compile_context>

<pallas_src>
import functools

import jax
import jax.numpy as jnp
from jax import lax
from jax.experimental import pallas as pl
from jax.experimental.pallas import tpu as pltpu


def _reservoir_kernel(x_ref, w_ref, o_ref, *, T, N, unroll, carry_dtype):
    """One batch tile: S0 = [x | 0]; repeat S = leaky_relu(S @ W, 0.1) T times."""
    D = x_ref.shape[-1]

    if T == 0:
        # Degenerate case: output is just the zero-padded input.
        o_ref[...] = jnp.zeros_like(o_ref)
        o_ref[:, :D] = x_ref[...].astype(o_ref.dtype)
        return

    w_dtype = w_ref.dtype

    # Iteration 1 shortcut: the zero-padded tail of S0 hits rows D..N of W and
    # contributes nothing, so compute (tile_b, D) @ (D, N) directly.
    x = x_ref[...].astype(w_dtype)
    w_head = w_ref[:D, :] if D < N else w_ref[...]
    y = jnp.dot(x, w_head, preferred_element_type=jnp.float32)
    # leaky_relu(y, 0.1) == max(y, 0.1*y) for slope in (0, 1): mul + max on VPU.
    s = jnp.maximum(y, 0.1 * y).astype(carry_dtype)

    w = w_ref[...]  # full [N, N], resident in VMEM (constant index_map, 1 buffer)

    # TODO(synk): weight-stationary MXU path (pltpu.matmul_push_rhs once, then
    # matmul_acc_lhs / matmul_pop per step) to avoid re-pushing W each iteration
    # when tile_b << N (small-batch inference).
    def body(_, s):
        y = jnp.dot(s.astype(w_dtype), w, preferred_element_type=jnp.float32)
        return jnp.maximum(y, 0.1 * y).astype(carry_dtype)

    s = lax.fori_loop(0, T - 1, body, s, unroll=unroll)
    o_ref[...] = s.astype(o_ref.dtype)


def _round_up(x, m):
    return ((int(x) + m - 1) // m) * m


def _vmem_budget_bytes():
    """~80% of this generation's VMEM (128 MiB v5e/v6e, 64 MiB per-TC v7x)."""
    try:
        cap = int(pltpu.get_tpu_info().vmem_capacity_bytes)
    except Exception:
        cap = 64 * 1024 * 1024  # conservative fallback
    return int(cap * 0.8)


def _pinned_weight_spec(N):
    """Weight BlockSpec: constant index_map; single-buffered where supported."""
    try:
        spec = pl.BlockSpec((N, N), lambda i: (0, 0), pipeline_mode=pl.Buffered(1))
        return spec, 1
    except (TypeError, AttributeError):
        # Older jax without pipeline_mode / Buffered -> default double buffering.
        return pl.BlockSpec((N, N), lambda i: (0, 0)), 2


def reservoir_forward(x, W, *, T, weight_dtype=jnp.bfloat16,
                      carry_dtype=jnp.bfloat16):
    """x: [B, input_dim], W: [N, N] -> [B, N] float32 (PyTorch-equivalent)."""
    B, D = x.shape
    N = W.shape[0]
    assert W.shape == (N, N)
    assert D <= N
    T = int(T)
    # TODO(synk): on v5e (no bf16 VPU) prefer carry_dtype=jnp.float32.

    W_c = W.astype(weight_dtype)
    w_bytes = jnp.dtype(weight_dtype).itemsize
    x_bytes = jnp.dtype(x.dtype).itemsize
    c_bytes = jnp.dtype(carry_dtype).itemsize

    vmem_budget = _vmem_budget_bytes()
    w_spec, w_bufs = _pinned_weight_spec(N)

    def vmem_needed(tb):
        return (
            w_bufs * N * N * w_bytes       # resident weight buffer(s)
            + 2 * tb * D * x_bytes         # x tiles (double-buffered by pipeline)
            + 2 * tb * N * 4               # f32 output tiles (double-buffered)
            + 2 * tb * N * 4               # live f32 matmul result + leaky slack
            + 1 * tb * N * c_bytes         # bf16 loop carry
        )

    # Batch tiling: large tiles amortize per-grid-step overhead; ensure >= 2
    # tiles when B is large enough so both v7x TensorCores get work.
    tile_b = min(512, _round_up(B, 8))
    if int(pl.cdiv(B, tile_b)) < 2 and B >= 128:
        tile_b = _round_up(pl.cdiv(B, 2), 8)
    # Rebalance tile size to minimize batch padding, then shrink to fit VMEM.
    tile_b = _round_up(pl.cdiv(B, pl.cdiv(B, tile_b)), 8)
    while tile_b > 8 and vmem_needed(tile_b) > vmem_budget:
        tile_b = max(8, _round_up(tile_b // 2, 8))

    # TODO(synk): K-tiled (streamed-W) variant for reservoirs whose weights do
    # not fit resident VMEM; the current design requires W fully in VMEM.
    assert vmem_needed(tile_b) <= vmem_budget, (
        f"Reservoir W too large for resident-VMEM kernel "
        f"(need {vmem_needed(tile_b)} bytes, budget {vmem_budget})")

    num_tiles = int(pl.cdiv(B, tile_b))
    Bp = num_tiles * tile_b
    x_p = x if Bp == B else jnp.pad(x, ((0, Bp - B), (0, 0)))  # pad in input dtype

    vmem_limit = int(min(vmem_budget, max(2 * vmem_needed(tile_b), 4 << 20)))

    # Adaptive unroll: only unroll the recurrence when the live state is small.
    state_bytes = tile_b * N * 4
    if state_bytes <= 64 * 1024:
        unroll = 4
    elif state_bytes <= 256 * 1024:
        unroll = 2
    else:
        unroll = 1
    unroll = max(1, min(unroll, max(T - 1, 1)))

    flops = 2 * Bp * (D * N + max(T - 1, 0) * N * N) if T > 0 else 0

    out = pl.pallas_call(
        functools.partial(_reservoir_kernel, T=T, N=N, unroll=unroll,
                          carry_dtype=carry_dtype),
        out_shape=jax.ShapeDtypeStruct((Bp, N), jnp.float32),
        grid_spec=pltpu.PrefetchScalarGridSpec(
            num_scalar_prefetch=0,
            grid=(num_tiles,),
            in_specs=[
                pl.BlockSpec((tile_b, D), lambda i: (i, 0)),
                w_spec,                                   # W pinned: fetched once
            ],
            out_specs=pl.BlockSpec((tile_b, N), lambda i: (i, 0)),
        ),
        compiler_params=pltpu.CompilerParams(
            dimension_semantics=("parallel",),  # v7x: batch tiles split over 2 TCs
            vmem_limit_bytes=vmem_limit,
        ),
        cost_estimate=pl.CostEstimate(
            flops=flops,
            transcendentals=0,
            bytes_accessed=Bp * D * x_bytes + N * N * w_bytes + Bp * N * 4,
        ),
    )(x_p, W_c)

    return out[:B] if Bp != B else out


def _reference_f32(x, W, *, T):
    """Pure-f32 PyTorch-equivalent forward."""
    N = W.shape[0]
    S = jnp.pad(x.astype(jnp.float32), ((0, 0), (0, N - x.shape[1])))
    for _ in range(T):
        y = S @ W
        S = jnp.where(y >= 0, y, 0.1 * y)
    return S


def _reference_matched(x, W_lp, *, T, carry_dtype=jnp.bfloat16):
    """Mirrors the kernel's bf16-input / f32-accumulate / bf16-carry chain."""
    N = W_lp.shape[0]
    S = jnp.pad(x.astype(jnp.float32), ((0, 0), (0, N - x.shape[1])))
    for _ in range(T):
        y = jnp.dot(S.astype(W_lp.dtype), W_lp, preferred_element_type=jnp.float32)
        S = jnp.maximum(y, 0.1 * y).astype(carry_dtype).astype(jnp.float32)
    return S


if __name__ == "__main__":
    # Module hyper-parameters (small, consistent with N = reservoir_n ** reservoir_d).
    reservoir_n = 2
    reservoir_d = 7
    N = reservoir_n ** reservoir_d      # 128
    input_dim = 32
    batch = 8
    T = 4
    reservoir_r = 3                     # connectivity radius: unused in forward

    key = jax.random.PRNGKey(0)
    kx, kw, km = jax.random.split(key, 3)

    # Deterministic synthetic "pre-trained" sparse reservoir weights, scaled so
    # T iterations stay numerically tame. (connectivity_mask / gradient hook
    # only affect backward; the forward pass uses W as-is.)
    w_dense = jax.random.normal(kw, (N, N), dtype=jnp.float32)
    sparsity = (jax.random.uniform(km, (N, N)) < 0.2).astype(jnp.float32)
    W = (w_dense * sparsity) * (0.9 / jnp.sqrt(0.2 * N))

    x = jax.random.normal(kx, (batch, input_dim), dtype=jnp.float32)

    out = jax.block_until_ready(reservoir_forward(x, W, T=T))
    assert out.shape == (batch, N)

    ref_matched = _reference_matched(x, W.astype(jnp.bfloat16), T=T)
    ref_f32 = _reference_f32(x, W, T=T)
    assert jnp.allclose(out, ref_matched, atol=5e-3, rtol=5e-3), "mismatch vs matched bf16 ref"
    # bf16 weights + bf16 carry drift slightly from the pure-f32 PyTorch forward.
    assert jnp.allclose(out, ref_f32, atol=1e-1, rtol=1e-1), "drift vs f32 reference too large"

    print("KERNEL_OK")
</pallas_src>

<mosaic_0001>
module attributes {stable_mosaic.version = 11 : i64} {
  func.func @_reservoir_kernel(%arg0: i32, %arg1: memref<8x32xf32, #tpu.memory_space<vmem>>, %arg2: memref<128x128xbf16, #tpu.memory_space<vmem>>, %arg3: memref<8x128xf32, #tpu.memory_space<vmem>>) attributes {dimension_semantics = [#tpu.dimension_semantics<parallel>], iteration_bounds = array<i64: 1>, scalar_prefetch = 0 : i64, scratch_operands = 0 : i64, tpu.core_type = #tpu.core_type<tc>, window_params = [{transform_indices = @transform_0, window_bounds = array<i64: 8, 32>}, {pipeline_mode = #tpu.pipeline_mode<synchronous>, transform_indices = @transform_1, window_bounds = array<i64: 128, 128>}, {transform_indices = @transform_2, window_bounds = array<i64: 8, 128>}]} {
    %c0 = arith.constant 0 : index
    %c0_0 = arith.constant 0 : index
    %0 = vector.load %arg1[%c0, %c0_0] : memref<8x32xf32, #tpu.memory_space<vmem>>, vector<8x32xf32>
    %1 = arith.truncf %0 : vector<8x32xf32> to vector<8x32xbf16>
    %c0_1 = arith.constant 0 : index
    %c0_2 = arith.constant 0 : index
    %2 = vector.load %arg2[%c0_1, %c0_2] : memref<128x128xbf16, #tpu.memory_space<vmem>>, vector<32x128xbf16>
    %cst = arith.constant dense<0.000000e+00> : vector<8x128xf32>
    %3 = tpu.matmul %1, %2, %cst {dimension_numbers = #tpu.dot_dimension_numbers<[1], [0], [0], [1], [0, 0, 1, 1], [], []>} : vector<8x32xbf16>, vector<32x128xbf16>, vector<8x128xf32> -> vector<8x128xf32>
    %cst_3 = arith.constant 1.000000e-01 : f32
    %4 = vector.broadcast %cst_3 : f32 to vector<8x128xf32>
    %5 = arith.mulf %4, %3 : vector<8x128xf32>
    %6 = arith.maximumf %3, %5 : vector<8x128xf32>
    %7 = arith.truncf %6 : vector<8x128xf32> to vector<8x128xbf16>
    %c0_4 = arith.constant 0 : index
    %c0_5 = arith.constant 0 : index
    %8 = vector.load %arg2[%c0_4, %c0_5] : memref<128x128xbf16, #tpu.memory_space<vmem>>, vector<128x128xbf16>
    %c0_i32 = arith.constant 0 : i32
    %cst_6 = arith.constant dense<0.000000e+00> : vector<8x128xf32>
    %9 = tpu.matmul %7, %8, %cst_6 {dimension_numbers = #tpu.dot_dimension_numbers<[1], [0], [0], [1], [0, 0, 1, 1], [], []>} : vector<8x128xbf16>, vector<128x128xbf16>, vector<8x128xf32> -> vector<8x128xf32>
    %cst_7 = arith.constant 1.000000e-01 : f32
    %10 = vector.broadcast %cst_7 : f32 to vector<8x128xf32>
    %11 = arith.mulf %10, %9 : vector<8x128xf32>
    %12 = arith.maximumf %9, %11 : vector<8x128xf32>
    %13 = arith.truncf %12 : vector<8x128xf32> to vector<8x128xbf16>
    %c1_i32 = arith.constant 1 : i32
    %cst_8 = arith.constant dense<0.000000e+00> : vector<8x128xf32>
    %14 = tpu.matmul %13, %8, %cst_8 {dimension_numbers = #tpu.dot_dimension_numbers<[1], [0], [0], [1], [0, 0, 1, 1], [], []>} : vector<8x128xbf16>, vector<128x128xbf16>, vector<8x128xf32> -> vector<8x128xf32>
    %cst_9 = arith.constant 1.000000e-01 : f32
    %15 = vector.broadcast %cst_9 : f32 to vector<8x128xf32>
    %16 = arith.mulf %15, %14 : vector<8x128xf32>
    %17 = arith.maximumf %14, %16 : vector<8x128xf32>
    %18 = arith.truncf %17 : vector<8x128xf32> to vector<8x128xbf16>
    %c2_i32 = arith.constant 2 : i32
    %cst_10 = arith.constant dense<0.000000e+00> : vector<8x128xf32>
    %19 = tpu.matmul %18, %8, %cst_10 {dimension_numbers = #tpu.dot_dimension_numbers<[1], [0], [0], [1], [0, 0, 1, 1], [], []>} : vector<8x128xbf16>, vector<128x128xbf16>, vector<8x128xf32> -> vector<8x128xf32>
    %cst_11 = arith.constant 1.000000e-01 : f32
    %20 = vector.broadcast %cst_11 : f32 to vector<8x128xf32>
    %21 = arith.mulf %20, %19 : vector<8x128xf32>
    %22 = arith.maximumf %19, %21 : vector<8x128xf32>
    %23 = arith.truncf %22 : vector<8x128xf32> to vector<8x128xbf16>
    %24 = arith.extf %23 : vector<8x128xbf16> to vector<8x128xf32>
    %c0_12 = arith.constant 0 : index
    %c0_13 = arith.constant 0 : index
    %25 = vector.load %arg3[%c0_12, %c0_13] : memref<8x128xf32, #tpu.memory_space<vmem>>, vector<8x128xf32>
    tpu.vector_store %arg3[%c0_12, %c0_13], %24 {strides = array<i32>} : memref<8x128xf32, #tpu.memory_space<vmem>>, vector<8x128xf32>,
    return
  }
  func.func @transform_0(%arg0: i32) -> (i32, i32) {
    %c0_i32 = arith.constant 0 : i32
    %c0_i32_0 = arith.constant 0 : i32
    return %arg0, %c0_i32 : i32, i32
  }
  func.func @transform_1(%arg0: i32) -> (i32, i32) {
    %c0_i32 = arith.constant 0 : i32
    %c0_i32_0 = arith.constant 0 : i32
    %c0_i32_1 = arith.constant 0 : i32
    return %c0_i32, %c0_i32_0 : i32, i32
  }
  func.func @transform_2(%arg0: i32) -> (i32, i32) {
    %c0_i32 = arith.constant 0 : i32
    %c0_i32_0 = arith.constant 0 : i32
    return %arg0, %c0_i32 : i32, i32
  }
}

</mosaic_0001>

<llo_original>
// kernel: tpu_custom_call.1
$region0: #{tpu_custom_call.1}
  #allocation0 [shape = 'u32[]', space=smem, size = 0x4, offset = 0x4, fixed_abs, tag = 'smem constant byte address 0x4 - core index']
  #allocation1 [shape = 'u32[72,128]{1,0:T(1,128)}', space=vmem, size = 0x9000, scoped, tag = 'internal scratch']
  %s0 = inlined_call_operand.hbm [shape: f32[8,32], index: 0, kind: input, shape index: {}]
  %s1 = inlined_call_operand.hbm [shape: bf16[128,128], index: 1, kind: input, shape index: {}]
  %s2 = inlined_call_operand.hbm [shape: f32[8,128], index: 2, kind: output, shape index: {}]
  %s3 = sld [smem:[#allocation0]]
  $region26: #{tpu_custom_call.1} parent=0
    _
  %s5 = ssub.s32 1, %s3
  %s6 = scalar_select 0, %s5, %s3
  $region1: #{tpu_custom_call.1} parent=0
    #allocation2 [shape = 'u8[4096]{0}', space=vmem, size = 0x1000, scoped, tag = 'input window, operand 0, single buffered']
    #allocation3 [shape = 's32[1]{0}', space=sflag, size = 0x4, scoped, tag = 'scoped memory for tpu_custom_call.1']
    #allocation4 [shape = 's32[1]{0}', space=sflag, size = 0x4, scoped, tag = 'scoped memory for tpu_custom_call.1']
    #allocation5 [shape = 'u8[32768]{0}', space=vmem, size = 0x8000, scoped, tag = 'input window, operand 1, single buffered']
    #allocation6 [shape = 's32[1]{0}', space=sflag, size = 0x4, scoped, tag = 'scoped memory for tpu_custom_call.1']
    #allocation7 [shape = 'u8[4096]{0}', space=vmem, size = 0x1000, scoped, tag = 'output window, operand 0, single buffered']
    %7 = vsyncpa [#allocation3], 0
    %8 = vsyncpa [#allocation6], 0
    %9 = vsyncpa [#allocation4], 0
    // Predicated region
    $region2: #{tpu_custom_call.1} parent=1 // pred_check
      _
    $region3: #{tpu_custom_call.1} parent=1 // pred_check_branch
      %11 = sbr.rel (0) target = $region5
    $region4: #{tpu_custom_call.1} parent=1 // pred_region
      %13 = vsyncadd [#allocation3], 0
      %s15 = sshll.u32 %s0, 4
      %s16 = int_to_ptr.hbm [resolvable:$true] %s15
      %s17 = sshll.u32 [#allocation2], 4
      %s18 = int_to_ptr.vmem [resolvable:$true] %s17
      %20 = dma.hbm_to_vmem [thread:$0]  %s16, 128, %s18, [#allocation3]
    $region5: #{tpu_custom_call.1} parent=1 // pred_fallthru
      _
    // Predicated region
    $region6: #{tpu_custom_call.1} parent=1 // pred_check
      _
    $region7: #{tpu_custom_call.1} parent=1 // pred_check_branch
      %22 = sbr.rel (0) target = $region9
    $region8: #{tpu_custom_call.1} parent=1 // pred_region
      %24 = vsyncadd [#allocation6], 0
      %s25 = sshll.u32 %s1, 4
      %s26 = int_to_ptr.hbm [resolvable:$true] %s25
      %s27 = sshll.u32 [#allocation5], 4
      %s28 = int_to_ptr.vmem [resolvable:$true] %s27
      %33 = dma.hbm_to_vmem [thread:$0]  %s26, 1024, %s28, [#allocation6], 64, 64, 4
    $region9: #{tpu_custom_call.1} parent=1 // pred_fallthru
      _
    // Predicated region
    $region10: #{tpu_custom_call.1} parent=1 // pred_check
      _
    $region11: #{tpu_custom_call.1} parent=1 // pred_check_branch
      %35 = sbr.rel (0) target = $region13
    $region12: #{tpu_custom_call.1} parent=1 // pred_region
      %37 = dma.done [#allocation3], 128
    $region13: #{tpu_custom_call.1} parent=1 // pred_fallthru
      _
    // Predicated region
    $region14: #{tpu_custom_call.1} parent=1 // pred_check
      _
    $region15: #{tpu_custom_call.1} parent=1 // pred_check_branch
      %39 = sbr.rel (0) target = $region17
    $region16: #{tpu_custom_call.1} parent=1 // pred_region
      %41 = dma.done [#allocation6], 1024
    $region17: #{tpu_custom_call.1} parent=1 // pred_fallthru
      _
    %v43 = vld [vmem:[#allocation2] sm:$0xff]
    %v44 = vpack.c.bf16 %v43, %v43
    %v45 = vld [vmem:[#allocation5] sm:$0xf]
    %v46 = vld [vmem:[#allocation5 + $0x4] sm:$0xf]
    %v47 = vld [vmem:[#allocation5 + $0x8] sm:$0xf]
    %v48 = vld [vmem:[#allocation5 + $0xc] sm:$0xf]
    %v53 = vunpack.c.l.b16 %v45
    %v54 = vunpack.c.l.b16 %v46
    %v55 = vunpack.c.l.b16 %v47
    %v56 = vunpack.c.l.b16 %v48
    %v57 = vpack.c.b16 %v54, %v53
    %v58 = vpack.c.b16 %v56, %v55
    %vm61 = vcmask 261120
    %v63 = vsel %vm61, %v44, 0
    %65 = vmatpush.bf16.msra.mxu0 0
    %66 = vmatpush.bf16.msra.mxu0 0
    %67 = vmatpush.bf16.msra.mxu0 0
    %68 = vmatpush.bf16.msra.mxu0 0
    %69 = vmatpush.bf16.msra.mxu0 0
    %70 = vmatpush.bf16.msra.mxu0 0
    %71 = vmatpush.bf16.msra.mxu0 %v58
    %72 = vmatpush.bf16.msra.mxu0 %v57
    %73 = vmatmul.bf16.gmra.mxu0 %v63
    %v74 = vpop.f32.mrf.mxu0
    %v75 = vadd.f32 0.0, %v74
    %v76 = vpop.f32.mrf.mxu0
    %77 = vdwg.mxu0
    %v78 = vmul.f32 %v75, 0.1
    %v79 = vmax.f32 %v75, %v78
    %v80 = vpack.c.bf16 %v79, %v79
    %v81 = vld [vmem:[#allocation5] sm:$0xf]
    %v82 = vld [vmem:[#allocation5 + $0x4] sm:$0xf]
    %v83 = vld [vmem:[#allocation5 + $0x8] sm:$0xf]
    %v84 = vld [vmem:[#allocation5 + $0xc] sm:$0xf]
    %v85 = vld [vmem:[#allocation5 + $0x10] sm:$0xf]
    %v86 = vld [vmem:[#allocation5 + $0x14] sm:$0xf]
    %v87 = vld [vmem:[#allocation5 + $0x18] sm:$0xf]
    %v88 = vld [vmem:[#allocation5 + $0x1c] sm:$0xf]
    %v89 = vld [vmem:[#allocation5 + $0x20] sm:$0xf]
    %v90 = vld [vmem:[#allocation5 + $0x24] sm:$0xf]
    %v91 = vld [vmem:[#allocation5 + $0x28] sm:$0xf]
    %v92 = vld [vmem:[#allocation5 + $0x2c] sm:$0xf]
    %v93 = vld [vmem:[#allocation5 + $0x30] sm:$0xf]
    %v94 = vld [vmem:[#allocation5 + $0x34] sm:$0xf]
    %v95 = vld [vmem:[#allocation5 + $0x38] sm:$0xf]
    %v96 = vld [vmem:[#allocation5 + $0x3c] sm:$0xf]
    %v113 = vunpack.c.l.b16 %v81
    %v114 = vunpack.c.l.b16 %v82
    %v115 = vunpack.c.l.b16 %v83
    %v116 = vunpack.c.l.b16 %v84
    %v117 = vunpack.c.l.b16 %v85
    %v118 = vunpack.c.l.b16 %v86
    %v119 = vunpack.c.l.b16 %v87
    %v120 = vunpack.c.l.b16 %v88
    %v121 = vunpack.c.l.b16 %v89
    %v122 = vunpack.c.l.b16 %v90
    %v123 = vunpack.c.l.b16 %v91
    %v124 = vunpack.c.l.b16 %v92
    %v125 = vunpack.c.l.b16 %v93
    %v126 = vunpack.c.l.b16 %v94
    %v127 = vunpack.c.l.b16 %v95
    %v128 = vunpack.c.l.b16 %v96
    %v129 = vpack.c.b16 %v114, %v113
    %v130 = vpack.c.b16 %v116, %v115
    %v131 = vpack.c.b16 %v118, %v117
    %v132 = vpack.c.b16 %v120, %v119
    %v133 = vpack.c.b16 %v122, %v121
    %v134 = vpack.c.b16 %v124, %v123
    %v135 = vpack.c.b16 %v126, %v125
    %v136 = vpack.c.b16 %v128, %v127
    %145 = vmatpush.bf16.msra.mxu0 %v136
    %146 = vmatpush.bf16.msra.mxu0 %v135
    %147 = vmatpush.bf16.msra.mxu0 %v134
    %148 = vmatpush.bf16.msra.mxu0 %v133
    %149 = vmatpush.bf16.msra.mxu0 %v132
    %150 = vmatpush.bf16.msra.mxu0 %v131
    %151 = vmatpush.bf16.msra.mxu0 %v130
    %152 = vmatpush.bf16.msra.mxu0 %v129
    %153 = vmatmul.bf16.gmra.mxu0 %v80
    %v154 = vpop.f32.mrf.mxu0
    %v155 = vadd.f32 0.0, %v154
    %v156 = vpop.f32.mrf.mxu0
    %157 = vdwg.mxu0
    %v158 = vmul.f32 %v155, 0.1
    %v159 = vmax.f32 %v155, %v158
    %v160 = vpack.c.bf16 %v159, %v159
    %161 = vmatpush.bf16.msra.mxu0 %v136
    %162 = vmatpush.bf16.msra.mxu0 %v135
    %163 = vmatpush.bf16.msra.mxu0 %v134
    %164 = vmatpush.bf16.msra.mxu0 %v133
    %165 = vmatpush.bf16.msra.mxu0 %v132
    %166 = vmatpush.bf16.msra.mxu0 %v131
    %167 = vmatpush.bf16.msra.mxu0 %v130
    %168 = vmatpush.bf16.msra.mxu0 %v129
    %169 = vmatmul.bf16.gmra.mxu0 %v160
    %v170 = vpop.f32.mrf.mxu0
    %v171 = vadd.f32 0.0, %v170
    %v172 = vpop.f32.mrf.mxu0
    %173 = vdwg.mxu0
    %v174 = vmul.f32 %v171, 0.1
    %v175 = vmax.f32 %v171, %v174
    %v176 = vpack.c.bf16 %v175, %v175
    %177 = vmatpush.bf16.msra.mxu0 %v136
    %178 = vmatpush.bf16.msra.mxu0 %v135
    %179 = vmatpush.bf16.msra.mxu0 %v134
    %180 = vmatpush.bf16.msra.mxu0 %v133
    %181 = vmatpush.bf16.msra.mxu0 %v132
    %182 = vmatpush.bf16.msra.mxu0 %v131
    %183 = vmatpush.bf16.msra.mxu0 %v130
    %184 = vmatpush.bf16.msra.mxu0 %v129
    %185 = vmatmul.bf16.gmra.mxu0 %v176
    %v186 = vpop.f32.mrf.mxu0
    %v187 = vadd.f32 0.0, %v186
    %v188 = vpop.f32.mrf.mxu0
    %189 = vdwg.mxu0
    %v190 = vmul.f32 %v187, 0.1
    %v191 = vmax.f32 %v187, %v190
    %v192 = vpack.c.bf16 %v191, %v191
    %v193 = vunpack.c.l.bf16 %v192
    %194 = vst [vmem:[#allocation7] sm:$0xff] %v193
    // Predicated region
    $region18: #{tpu_custom_call.1} parent=1 // pred_check
      _
    $region19: #{tpu_custom_call.1} parent=1 // pred_check_branch
      %196 = sbr.rel (0) target = $region21
    $region20: #{tpu_custom_call.1} parent=1 // pred_region
      %198 = vsyncadd [#allocation4], 0
      %s200 = sshll.u32 [#allocation7], 4
      %s201 = int_to_ptr.vmem [resolvable:$true] %s200
      %s202 = sshll.u32 %s2, 4
      %s203 = int_to_ptr.hbm [resolvable:$true] %s202
      %205 = dma.vmem_to_hbm [thread:$0]  %s201, 128, %s203, [#allocation4]
    $region21: #{tpu_custom_call.1} parent=1 // pred_fallthru
      _
    // Predicated region
    $region22: #{tpu_custom_call.1} parent=1 // pred_check
      _
    $region23: #{tpu_custom_call.1} parent=1 // pred_check_branch
      %207 = sbr.rel (0) target = $region25
    $region24: #{tpu_custom_call.1} parent=1 // pred_region
      %209 = dma.done [#allocation4], 128
    $region25: #{tpu_custom_call.1} parent=1 // pred_fallthru
      _
    %210 = vsyncpa [#allocation3], 1
    %211 = vsyncpa [#allocation6], 1
    %212 = vsyncpa [#allocation4], 1

</llo_original>
